<compile_context>
chip_gen: v7x
topology: tpu7x:2x2x1
jax: 0.10.0
libtpu: 0.0.40
codegen_flags: <defaults>
</compile_context>

<pallas_src>
import jax
import jax.numpy as jnp
from jax.experimental import pallas as pl
from jax.experimental.pallas import tpu as pltpu

_LANE = 128      # vreg lane width
_SUBLANE = 8     # f32 sublanes per vreg

# Double-buffered block budget (+slack) kept <= 48 MiB: safe on v7x (64 MiB
# physical per core) and explicitly raised above v5e/v6e scoped defaults.
_VMEM_BLOCK_BUDGET = 40 * 1024 * 1024
_VMEM_SLACK = 8 * 1024 * 1024

# Default max batch-tile per layout (both derived from the VMEM budget):
#  * batch-major (bt, 10) blocks: lane padding costs ~512 B/sample/buffer.
#  * feature-major (10, bt) blocks: only ~96 B/sample across all buffers,
#    so the tile can be much larger (better per-step overhead amortization).
_DEFAULT_BT_ROWS = 16384
_DEFAULT_BT_COLS = 65536

# Per-sample VMEM bytes of the double-buffered x + out blocks, per layout.
_VMEM_PER_SAMPLE_ROWS = 2 * (_LANE * 4) + 2 * (_LANE * 4)          # 2048 B
_VMEM_PER_SAMPLE_COLS = 2 * (2 * _SUBLANE * 4) + 2 * (_SUBLANE * 4)  # 192 B


def _round_up(v, m):
    return ((v + m - 1) // m) * m


def _round_down(v, m):
    return (v // m) * m


def _pick_bt(batch, max_bt, vmem_bytes_per_sample):
    """Batch-tile size: multiple of 128, inside the VMEM budget, >=2 tiles
    for big batches so v7x's two TensorCores both get grid steps."""
    max_bt = max(_LANE, _round_down(int(max_bt), _LANE))          # lane multiple
    vmem_cap = max(_LANE, _round_down(_VMEM_BLOCK_BUDGET // vmem_bytes_per_sample,
                                      _LANE))
    b_ceil = _round_up(batch, _LANE)
    bt = min(max_bt, vmem_cap, b_ceil)
    if bt >= b_ceil and b_ceil >= 16 * _LANE:                      # big enough to split
        bt = _round_up(pl.cdiv(b_ceil, 2), _LANE)
    return bt


def _logreg_rows_kernel(x_ref, w_ref, b_ref, o_ref):
    """Batch-major (native) layout.
    x_ref: (bt, IN)  w_ref: (1, IN) VMEM  b_ref: (1,) SMEM  o_ref: (bt, 1)."""
    x = x_ref[...].astype(jnp.float32)
    w = w_ref[...].astype(jnp.float32)
    # VPU broadcast multiply + XLU lane reduce; no MXU (K=10, N=1 is padding).
    z = jnp.sum(x * w, axis=1, keepdims=True) + b_ref[0]
    o_ref[...] = jax.nn.sigmoid(z).astype(o_ref.dtype)             # EUP


def _logreg_cols_kernel(x_t_ref, w_ref, b_ref, o_ref):
    """Feature-major (pre-transposed producer) layout; fully lane-dense.
    x_t_ref: (IN, bt)  w_ref: (IN,) SMEM  b_ref: (1,) SMEM  o_ref: (1, bt)."""
    n_feat = x_t_ref.shape[0]
    # Unrolled scalar * row accumulate (weights from SMEM): no w DMA stream,
    # no (IN, bt) product temp in VMEM.
    z = b_ref[0] + w_ref[0] * x_t_ref[0, :].astype(jnp.float32)
    for k in range(1, n_feat):
        z = z + w_ref[k] * x_t_ref[k, :].astype(jnp.float32)
    o_ref[0, :] = jax.nn.sigmoid(z).astype(o_ref.dtype)


def logistic_regression(x, w, b, *, batch_major=True, max_bt=None,
                        min_pallas_batch=4096):
    """sigmoid(features @ w + b), the forward of torch.nn.Linear(10,1)+sigmoid.

    x: (B, IN) float32/bfloat16 if batch_major, else (IN, B)
    w: (IN, 1) float32, b: (1,) float32
    returns: (B, 1) in x.dtype
    """
    w = jnp.asarray(w)
    b = jnp.asarray(b)
    n_in, n_out = w.shape
    assert n_out == 1, "LogisticRegression has a single output unit"
    if batch_major:
        batch, feat = x.shape
    else:
        feat, batch = x.shape
    assert feat == n_in
    out_dtype = x.dtype

    # Small-batch fast path: a single grid step costs ~0.35 us of fixed
    # overhead, so let XLA fuse tiny batches (review item).
    if batch < min_pallas_batch:
        xb = x if batch_major else jnp.transpose(x)
        z = xb.astype(jnp.float32) @ w.astype(jnp.float32) + b.astype(jnp.float32)[None, :]
        return jax.nn.sigmoid(z).astype(out_dtype)

    w32 = w.astype(jnp.float32)
    b32 = b.astype(jnp.float32)

    cost = pl.CostEstimate(
        flops=2 * batch * n_in,
        transcendentals=batch,
        bytes_accessed=int(x.size) * x.dtype.itemsize
        + batch * jnp.dtype(out_dtype).itemsize
        + int(w.size) * 4 + int(b.size) * 4,
    )

    if batch_major:
        # ---- native (B, IN) consumption: no host transpose, no host pad ----
        bt = _pick_bt(batch, _DEFAULT_BT_ROWS if max_bt is None else max_bt,
                      _VMEM_PER_SAMPLE_ROWS)
        vmem_limit = int(max(32 << 20, min(48 << 20,
                                           bt * _VMEM_PER_SAMPLE_ROWS + _VMEM_SLACK)))
        padded = batch
        if batch < bt:
            # Tiny batch forced down the Pallas path: pad rows to one full tile.
            # (Large batches are never copied; a ragged last tile is masked.)
            padded = bt
            x = jnp.pad(x, ((0, bt - batch), (0, 0)))
        grid = (pl.cdiv(padded, bt),)
        out = pl.pallas_call(
            _logreg_rows_kernel,
            out_shape=jax.ShapeDtypeStruct((padded, 1), out_dtype),
            grid=grid,
            in_specs=[
                pl.BlockSpec((bt, n_in), lambda i: (i, 0)),           # x, native layout
                pl.BlockSpec((1, n_in), lambda i: (0, 0)),            # weight row (resident)
                pl.BlockSpec(memory_space=pltpu.MemorySpace.SMEM),    # bias scalar
            ],
            out_specs=pl.BlockSpec((bt, 1), lambda i: (i, 0)),        # narrow (bt,1) store
            compiler_params=pltpu.CompilerParams(
                dimension_semantics=("parallel",),
                vmem_limit_bytes=vmem_limit),
            cost_estimate=cost,
        )(x, w32.reshape(1, n_in), b32)
        return out[:batch] if padded != batch else out

    # ---- feature-major (IN, B) producer: lane-dense batch, roofline path ----
    bt = _pick_bt(batch, _DEFAULT_BT_COLS if max_bt is None else max_bt,
                  _VMEM_PER_SAMPLE_COLS)
    vmem_limit = int(max(32 << 20, min(48 << 20,
                                       bt * _VMEM_PER_SAMPLE_COLS + _VMEM_SLACK)))
    padded = batch
    if batch < bt:
        padded = bt
        x = jnp.pad(x, ((0, 0), (0, bt - batch)))
    grid = (pl.cdiv(padded, bt),)
    out_t = pl.pallas_call(
        _logreg_cols_kernel,
        out_shape=jax.ShapeDtypeStruct((1, padded), out_dtype),
        grid=grid,
        in_specs=[
            pl.BlockSpec((n_in, bt), lambda i: (0, i)),               # x^T batch tile
            pl.BlockSpec(memory_space=pltpu.MemorySpace.SMEM),        # 10 weight scalars
            pl.BlockSpec(memory_space=pltpu.MemorySpace.SMEM),        # bias scalar
        ],
        out_specs=pl.BlockSpec((1, bt), lambda i: (0, i)),            # lane-dense stores
        compiler_params=pltpu.CompilerParams(
            dimension_semantics=("parallel",),
            vmem_limit_bytes=vmem_limit),
        cost_estimate=cost,
    )(x, w32.reshape(n_in), b32)
    return out_t[0, :batch].reshape(batch, 1)


if __name__ == "__main__":
    key = jax.random.PRNGKey(0)
    k_x, k_w, k_b, k_x2 = jax.random.split(key, 4)

    IN, OUT = 10, 1  # matches torch.nn.Linear(10, 1)
    bound = 1.0 / jnp.sqrt(jnp.float32(IN))
    w = jax.random.uniform(k_w, (IN, OUT), jnp.float32, -bound, bound)
    b = jax.random.uniform(k_b, (OUT,), jnp.float32, -bound, bound)

    def ref(xx):
        return jax.nn.sigmoid(xx.astype(jnp.float32) @ w + b[None, :])

    # 1) Tiny demo batch (B=8), forced through the Pallas batch-major path.
    x8 = jax.random.normal(k_x, (8, IN), jnp.float32)
    out8 = jax.block_until_ready(logistic_regression(x8, w, b, min_pallas_batch=0))
    assert out8.shape == (8, OUT)
    assert jnp.allclose(out8, ref(x8), atol=1e-5), "batch-major mismatch"

    # 2) Multi-tile batch-major path (3 full grid steps, no host pad).
    x384 = jax.random.normal(k_x2, (384, IN), jnp.float32)
    out384 = jax.block_until_ready(
        logistic_regression(x384, w, b, max_bt=128, min_pallas_batch=0))
    assert jnp.allclose(out384, ref(x384), atol=1e-5), "multi-tile mismatch"

    # 3) Feature-major producer path (x already laid out as (IN, B)).
    xt = jnp.transpose(x384)
    out_t = jax.block_until_ready(
        logistic_regression(xt, w, b, batch_major=False, max_bt=128,
                            min_pallas_batch=0))
    assert jnp.allclose(out_t, ref(x384), atol=1e-5), "feature-major mismatch"

    # 4) bfloat16 activations (halves the dominant HBM read stream).
    xb = x8.astype(jnp.bfloat16)
    outb = jax.block_until_ready(logistic_regression(xb, w, b, min_pallas_batch=0))
    assert jnp.allclose(outb.astype(jnp.float32), ref(x8), atol=2e-2), "bf16 mismatch"

    # 5) Small-batch XLA fast path (no pallas_call).
    out_fast = jax.block_until_ready(logistic_regression(x8, w, b))
    assert jnp.allclose(out_fast, ref(x8), atol=1e-5), "fast-path mismatch"

    print("KERNEL_OK")
</pallas_src>

<mosaic_0001>
module attributes {stable_mosaic.version = 11 : i64} {
  func.func @_logreg_rows_kernel(%arg0: i32, %arg1: memref<128x10xf32, #tpu.memory_space<vmem>>, %arg2: memref<1x10xf32, #tpu.memory_space<vmem>>, %arg3: memref<1xf32, #tpu.memory_space<smem>>, %arg4: memref<128x1xf32, #tpu.memory_space<vmem>>) attributes {dimension_semantics = [#tpu.dimension_semantics<parallel>], iteration_bounds = array<i64: 1>, scalar_prefetch = 0 : i64, scratch_operands = 0 : i64, tpu.core_type = #tpu.core_type<tc>, window_params = [{transform_indices = @transform_0, window_bounds = array<i64: 128, 10>}, {pipeline_mode = #tpu.pipeline_mode<synchronous>, transform_indices = @transform_1, window_bounds = array<i64: 1, 10>}, {transform_indices = @transform_2, window_bounds = array<i64: 1>}, {transform_indices = @transform_3, window_bounds = array<i64: 128, 1>}]} {
    %c0 = arith.constant 0 : index
    %c0_0 = arith.constant 0 : index
    %0 = vector.load %arg1[%c0, %c0_0] : memref<128x10xf32, #tpu.memory_space<vmem>>, vector<128x10xf32>
    %c0_1 = arith.constant 0 : index
    %c0_2 = arith.constant 0 : index
    %1 = vector.load %arg2[%c0_1, %c0_2] : memref<1x10xf32, #tpu.memory_space<vmem>>, vector<1x10xf32>
    %2 = vector.broadcast %1 : vector<1x10xf32> to vector<128x10xf32>
    %3 = arith.mulf %0, %2 : vector<128x10xf32>
    %cst = arith.constant dense<0.000000e+00> : vector<128xf32>
    %4 = vector.multi_reduction <add>, %3, %cst [1] : vector<128x10xf32> to vector<128xf32>
    %5 = vector.shape_cast %4 : vector<128xf32> to vector<128x1xf32>
    %c0_3 = arith.constant 0 : index
    %6 = memref.load %arg3[%c0_3] : memref<1xf32, #tpu.memory_space<smem>>
    %7 = vector.broadcast %6 : f32 to vector<128x1xf32>
    %8 = arith.addf %5, %7 : vector<128x1xf32>
    %9 = arith.negf %8 : vector<128x1xf32>
    %10 = math.exp %9 : vector<128x1xf32>
    %cst_4 = arith.constant 1.000000e+00 : f32
    %11 = vector.broadcast %cst_4 : f32 to vector<128x1xf32>
    %12 = arith.addf %11, %10 : vector<128x1xf32>
    %13 = arith.divf %11, %12 : vector<128x1xf32>
    %c0_5 = arith.constant 0 : index
    %c0_6 = arith.constant 0 : index
    %14 = vector.load %arg4[%c0_5, %c0_6] : memref<128x1xf32, #tpu.memory_space<vmem>>, vector<128x1xf32>
    tpu.vector_store %arg4[%c0_5, %c0_6], %13 {strides = array<i32>} : memref<128x1xf32, #tpu.memory_space<vmem>>, vector<128x1xf32>,
    return
  }
  func.func @transform_0(%arg0: i32) -> (i32, i32) {
    %c0_i32 = arith.constant 0 : i32
    %c0_i32_0 = arith.constant 0 : i32
    return %arg0, %c0_i32 : i32, i32
  }
  func.func @transform_1(%arg0: i32) -> (i32, i32) {
    %c0_i32 = arith.constant 0 : i32
    %c0_i32_0 = arith.constant 0 : i32
    %c0_i32_1 = arith.constant 0 : i32
    return %c0_i32, %c0_i32_0 : i32, i32
  }
  func.func @transform_2(%arg0: i32) -> i32 {
    %c0_i32 = arith.constant 0 : i32
    %c0_i32_0 = arith.constant 0 : i32
    return %c0_i32 : i32
  }
  func.func @transform_3(%arg0: i32) -> (i32, i32) {
    %c0_i32 = arith.constant 0 : i32
    %c0_i32_0 = arith.constant 0 : i32
    return %arg0, %c0_i32 : i32, i32
  }
}

</mosaic_0001>

<llo_original>
// kernel: tpu_custom_call.1
$region0: #{tpu_custom_call.1}
  #allocation0 [shape = 'u32[]', space=smem, size = 0x4, offset = 0x4, fixed_abs, tag = 'smem constant byte address 0x4 - core index']
  #allocation1 [shape = 'u32[144,128]{1,0:T(1,128)}', space=vmem, size = 0x12000, scoped, tag = 'internal scratch']
  #allocation2 [shape = 'f32[1]{0:T(128)S(6)}', space=smem, size = 0x200, scoped, tag = 'scoped memory for tpu_custom_call.1']
  %s0 = inlined_call_operand.vmem [shape: f32[128,10], index: 0, kind: input, shape index: {}]
  %s1 = inlined_call_operand.vmem [shape: f32[1,10], index: 1, kind: input, shape index: {}]
  %s2 = inlined_call_operand.<no memory space> [shape: f32[1], index: 2, kind: input, shape index: {}]
  %s3 = inlined_call_operand.vmem [shape: f32[128,1], index: 3, kind: output, shape index: {}]
  %s4 = sld [smem:[#allocation0]]
  $region22: #{tpu_custom_call.1} parent=0
    _
  %s6 = ssub.s32 1, %s4
  %s7 = scalar_select 0, %s6, %s4
  %8 = sst [smem:[#allocation2]] %s2
  // Predicated region
  $region2: #{tpu_custom_call.1} parent=0 // pred_check
    _
  $region3: #{tpu_custom_call.1} parent=0 // pred_check_branch
    %10 = sbr.rel (0) target = $region5
  $region4: #{tpu_custom_call.1} parent=0 // pred_region
    _
  $region5: #{tpu_custom_call.1} parent=0 // pred_fallthru
    _
  // Predicated region
  $region6: #{tpu_custom_call.1} parent=0 // pred_check
    _
  $region7: #{tpu_custom_call.1} parent=0 // pred_check_branch
    %12 = sbr.rel (0) target = $region9
  $region8: #{tpu_custom_call.1} parent=0 // pred_region
    _
  $region9: #{tpu_custom_call.1} parent=0 // pred_fallthru
    _
  // Predicated region
  $region10: #{tpu_custom_call.1} parent=0 // pred_check
    _
  $region11: #{tpu_custom_call.1} parent=0 // pred_check_branch
    %14 = sbr.rel (0) target = $region13
  $region12: #{tpu_custom_call.1} parent=0 // pred_region
    _
  $region13: #{tpu_custom_call.1} parent=0 // pred_fallthru
    _
  %v15 = vld [vmem:[%s0] sm:$0xff]
  %v16 = vld [vmem:[%s0 + $0x8] sm:$0xff]
  %v17 = vld [vmem:[%s0 + $0x10] sm:$0xff]
  %v18 = vld [vmem:[%s0 + $0x18] sm:$0xff]
  %v19 = vld [vmem:[%s0 + $0x20] sm:$0xff]
  %v20 = vld [vmem:[%s0 + $0x28] sm:$0xff]
  %v21 = vld [vmem:[%s0 + $0x30] sm:$0xff]
  %v22 = vld [vmem:[%s0 + $0x38] sm:$0xff]
  %v23 = vld [vmem:[%s0 + $0x40] sm:$0xff]
  %v24 = vld [vmem:[%s0 + $0x48] sm:$0xff]
  %v25 = vld [vmem:[%s0 + $0x50] sm:$0xff]
  %v26 = vld [vmem:[%s0 + $0x58] sm:$0xff]
  %v27 = vld [vmem:[%s0 + $0x60] sm:$0xff]
  %v28 = vld [vmem:[%s0 + $0x68] sm:$0xff]
  %v29 = vld [vmem:[%s0 + $0x70] sm:$0xff]
  %v30 = vld [vmem:[%s0 + $0x78] sm:$0xff]
  %v31 = vld [vmem:[%s1] sm:$0x1]
  %v33 = vlaneseq
  %v34 = vshrl.u32 %v33, 7
  %v35 = vsub.s32 0, %v34
  %v36 = vrot.slane %v31, %v35
  %v38 = vmul.f32 %v15, %v36
  %v39 = vmul.f32 %v16, %v36
  %v40 = vmul.f32 %v17, %v36
  %v41 = vmul.f32 %v18, %v36
  %v42 = vmul.f32 %v19, %v36
  %v43 = vmul.f32 %v20, %v36
  %v44 = vmul.f32 %v21, %v36
  %v45 = vmul.f32 %v22, %v36
  %v46 = vmul.f32 %v23, %v36
  %v47 = vmul.f32 %v24, %v36
  %v48 = vmul.f32 %v25, %v36
  %v49 = vmul.f32 %v26, %v36
  %v50 = vmul.f32 %v27, %v36
  %v51 = vmul.f32 %v28, %v36
  %v52 = vmul.f32 %v29, %v36
  %v53 = vmul.f32 %v30, %v36
  %vm54 = vcmask 80896
  %v55 = vsel %vm54, %v38, 0.0
  %56 = vadd.xlane.f32.xlu0 %v55
  %v57 = vpop.xlane.xlu0 %56
  %v58 = vsel %vm54, %v39, 0.0
  %59 = vadd.xlane.f32.xlu0 %v58
  %v60 = vpop.xlane.xlu0 %59
  %v61 = vsel %vm54, %v40, 0.0
  %62 = vadd.xlane.f32.xlu0 %v61
  %v63 = vpop.xlane.xlu0 %62
  %v64 = vsel %vm54, %v41, 0.0
  %65 = vadd.xlane.f32.xlu0 %v64
  %v66 = vpop.xlane.xlu0 %65
  %v67 = vsel %vm54, %v42, 0.0
  %68 = vadd.xlane.f32.xlu0 %v67
  %v69 = vpop.xlane.xlu0 %68
  %v70 = vsel %vm54, %v43, 0.0
  %71 = vadd.xlane.f32.xlu0 %v70
  %v72 = vpop.xlane.xlu0 %71
  %v73 = vsel %vm54, %v44, 0.0
  %74 = vadd.xlane.f32.xlu0 %v73
  %v75 = vpop.xlane.xlu0 %74
  %v76 = vsel %vm54, %v45, 0.0
  %77 = vadd.xlane.f32.xlu0 %v76
  %v78 = vpop.xlane.xlu0 %77
  %v79 = vsel %vm54, %v46, 0.0
  %80 = vadd.xlane.f32.xlu0 %v79
  %v81 = vpop.xlane.xlu0 %80
  %v82 = vsel %vm54, %v47, 0.0
  %83 = vadd.xlane.f32.xlu0 %v82
  %v84 = vpop.xlane.xlu0 %83
  %v85 = vsel %vm54, %v48, 0.0
  %86 = vadd.xlane.f32.xlu0 %v85
  %v87 = vpop.xlane.xlu0 %86
  %v88 = vsel %vm54, %v49, 0.0
  %89 = vadd.xlane.f32.xlu0 %v88
  %v90 = vpop.xlane.xlu0 %89
  %v91 = vsel %vm54, %v50, 0.0
  %92 = vadd.xlane.f32.xlu0 %v91
  %v93 = vpop.xlane.xlu0 %92
  %v94 = vsel %vm54, %v51, 0.0
  %95 = vadd.xlane.f32.xlu0 %v94
  %v96 = vpop.xlane.xlu0 %95
  %v97 = vsel %vm54, %v52, 0.0
  %98 = vadd.xlane.f32.xlu0 %v97
  %v99 = vpop.xlane.xlu0 %98
  %v100 = vsel %vm54, %v53, 0.0
  %101 = vadd.xlane.f32.xlu0 %v100
  %v102 = vpop.xlane.xlu0 %101
  %s103 = sld [smem:[#allocation2]]
  %v104 = vstv %s103
  %v105 = vadd.f32 %v57, %v104
  %v106 = vadd.f32 %v60, %v104
  %v107 = vadd.f32 %v63, %v104
  %v108 = vadd.f32 %v66, %v104
  %v109 = vadd.f32 %v69, %v104
  %v110 = vadd.f32 %v72, %v104
  %v111 = vadd.f32 %v75, %v104
  %v112 = vadd.f32 %v78, %v104
  %v113 = vadd.f32 %v81, %v104
  %v114 = vadd.f32 %v84, %v104
  %v115 = vadd.f32 %v87, %v104
  %v116 = vadd.f32 %v90, %v104
  %v117 = vadd.f32 %v93, %v104
  %v118 = vadd.f32 %v96, %v104
  %v119 = vadd.f32 %v99, %v104
  %v120 = vadd.f32 %v102, %v104
  %v121 = vxor.u32 %v105, 2147483648
  %v122 = vxor.u32 %v106, 2147483648
  %v123 = vxor.u32 %v107, 2147483648
  %v124 = vxor.u32 %v108, 2147483648
  %v125 = vxor.u32 %v109, 2147483648
  %v126 = vxor.u32 %v110, 2147483648
  %v127 = vxor.u32 %v111, 2147483648
  %v128 = vxor.u32 %v112, 2147483648
  %v129 = vxor.u32 %v113, 2147483648
  %v130 = vxor.u32 %v114, 2147483648
  %v131 = vxor.u32 %v115, 2147483648
  %v132 = vxor.u32 %v116, 2147483648
  %v133 = vxor.u32 %v117, 2147483648
  %v134 = vxor.u32 %v118, 2147483648
  %v135 = vxor.u32 %v119, 2147483648
  %v136 = vxor.u32 %v120, 2147483648
  %v137 = vmul.f32 %v121, 1.442695
  %v138 = vpow.pop %v137
  %v139 = vmul.f32 %v122, 1.442695
  %v140 = vpow.pop %v139
  %v141 = vmul.f32 %v123, 1.442695
  %v142 = vpow.pop %v141
  %v143 = vmul.f32 %v124, 1.442695
  %v144 = vpow.pop %v143
  %v145 = vmul.f32 %v125, 1.442695
  %v146 = vpow.pop %v145
  %v147 = vmul.f32 %v126, 1.442695
  %v148 = vpow.pop %v147
  %v149 = vmul.f32 %v127, 1.442695
  %v150 = vpow.pop %v149
  %v151 = vmul.f32 %v128, 1.442695
  %v152 = vpow.pop %v151
  %v153 = vmul.f32 %v129, 1.442695
  %v154 = vpow.pop %v153
  %v155 = vmul.f32 %v130, 1.442695
  %v156 = vpow.pop %v155
  %v157 = vmul.f32 %v131, 1.442695
  %v158 = vpow.pop %v157
  %v159 = vmul.f32 %v132, 1.442695
  %v160 = vpow.pop %v159
  %v161 = vmul.f32 %v133, 1.442695
  %v162 = vpow.pop %v161
  %v163 = vmul.f32 %v134, 1.442695
  %v164 = vpow.pop %v163
  %v165 = vmul.f32 %v135, 1.442695
  %v166 = vpow.pop %v165
  %v167 = vmul.f32 %v136, 1.442695
  %v168 = vpow.pop %v167
  %v169 = vadd.f32 %v138, 1.0
  %v170 = vadd.f32 %v140, 1.0
  %v171 = vadd.f32 %v142, 1.0
  %v172 = vadd.f32 %v144, 1.0
  %v173 = vadd.f32 %v146, 1.0
  %v174 = vadd.f32 %v148, 1.0
  %v175 = vadd.f32 %v150, 1.0
  %v176 = vadd.f32 %v152, 1.0
  %v177 = vadd.f32 %v154, 1.0
  %v178 = vadd.f32 %v156, 1.0
  %v179 = vadd.f32 %v158, 1.0
  %v180 = vadd.f32 %v160, 1.0
  %v181 = vadd.f32 %v162, 1.0
  %v182 = vadd.f32 %v164, 1.0
  %v183 = vadd.f32 %v166, 1.0
  %v184 = vadd.f32 %v168, 1.0
  %v185 = vrcp.pop %v169
  %v186 = vmul.f32 1.0, %v185
  %v187 = vrcp.pop %v170
  %v188 = vmul.f32 1.0, %v187
  %v189 = vrcp.pop %v171
  %v190 = vmul.f32 1.0, %v189
  %v191 = vrcp.pop %v172
  %v192 = vmul.f32 1.0, %v191
  %v193 = vrcp.pop %v173
  %v194 = vmul.f32 1.0, %v193
  %v195 = vrcp.pop %v174
  %v196 = vmul.f32 1.0, %v195
  %v197 = vrcp.pop %v175
  %v198 = vmul.f32 1.0, %v197
  %v199 = vrcp.pop %v176
  %v200 = vmul.f32 1.0, %v199
  %v201 = vrcp.pop %v177
  %v202 = vmul.f32 1.0, %v201
  %v203 = vrcp.pop %v178
  %v204 = vmul.f32 1.0, %v203
  %v205 = vrcp.pop %v179
  %v206 = vmul.f32 1.0, %v205
  %v207 = vrcp.pop %v180
  %v208 = vmul.f32 1.0, %v207
  %v209 = vrcp.pop %v181
  %v210 = vmul.f32 1.0, %v209
  %v211 = vrcp.pop %v182
  %v212 = vmul.f32 1.0, %v211
  %v213 = vrcp.pop %v183
  %v214 = vmul.f32 1.0, %v213
  %v215 = vrcp.pop %v184
  %v216 = vmul.f32 1.0, %v215
  %vm217 = vcmask 7168
  %218 = vst.msk [vmem:[%s3] sm:$0xff] %vm217, %v186
  %219 = vst.msk [vmem:[%s3 + $0x8] sm:$0xff] %vm217, %v188
  %220 = vst.msk [vmem:[%s3 + $0x10] sm:$0xff] %vm217, %v190
  %221 = vst.msk [vmem:[%s3 + $0x18] sm:$0xff] %vm217, %v192
  %222 = vst.msk [vmem:[%s3 + $0x20] sm:$0xff] %vm217, %v194
  %223 = vst.msk [vmem:[%s3 + $0x28] sm:$0xff] %vm217, %v196
  %224 = vst.msk [vmem:[%s3 + $0x30] sm:$0xff] %vm217, %v198
  %225 = vst.msk [vmem:[%s3 + $0x38] sm:$0xff] %vm217, %v200
  %226 = vst.msk [vmem:[%s3 + $0x40] sm:$0xff] %vm217, %v202
  %227 = vst.msk [vmem:[%s3 + $0x48] sm:$0xff] %vm217, %v204
  %228 = vst.msk [vmem:[%s3 + $0x50] sm:$0xff] %vm217, %v206
  %229 = vst.msk [vmem:[%s3 + $0x58] sm:$0xff] %vm217, %v208
  %230 = vst.msk [vmem:[%s3 + $0x60] sm:$0xff] %vm217, %v210
  %231 = vst.msk [vmem:[%s3 + $0x68] sm:$0xff] %vm217, %v212
  %232 = vst.msk [vmem:[%s3 + $0x70] sm:$0xff] %vm217, %v214
  %233 = vst.msk [vmem:[%s3 + $0x78] sm:$0xff] %vm217, %v216
  // Predicated region
  $region14: #{tpu_custom_call.1} parent=0 // pred_check
    _
  $region15: #{tpu_custom_call.1} parent=0 // pred_check_branch
    %235 = sbr.rel (0) target = $region17
  $region16: #{tpu_custom_call.1} parent=0 // pred_region
    _
  $region17: #{tpu_custom_call.1} parent=0 // pred_fallthru
    _
  // Predicated region
  $region18: #{tpu_custom_call.1} parent=0 // pred_check
    _
  $region19: #{tpu_custom_call.1} parent=0 // pred_check_branch
    %237 = sbr.rel (0) target = $region21
  $region20: #{tpu_custom_call.1} parent=0 // pred_region
    _
  $region21: #{tpu_custom_call.1} parent=0 // pred_fallthru
    _

</llo_original>
